<compile_context>
chip_gen: v7x
topology: tpu7x:2x2x1
jax: 0.10.0
libtpu: 0.0.40
codegen_flags: <defaults>
</compile_context>

<pallas_src>
import jax
import jax.numpy as jnp
from jax.experimental import pallas as pl
from jax.experimental.pallas import tpu as pltpu

INPUT_DIM = 89
HIDDEN = 128
OUT_DIM = 64
LANE = 128


def _fused_linear_kernel(x_ref, w_ref, b_ref, o_ref):
    # Single MXU matmul per grid step; f32 accumulate; bias add on the VPU in f32.
    y = jnp.dot(x_ref[...], w_ref[...], preferred_element_type=jnp.float32)
    o_ref[...] = (y + b_ref[...]).astype(o_ref.dtype)


def organization_model_forward(x, w1, b1, w2, b2, *, tile_rows=1024,
                               compute_dtype=jnp.float32):
    """x: (B, INPUT_DIM) -> (B, OUT_DIM) float32.

    Weights are stored pre-transposed vs. PyTorch:
      w1: (INPUT_DIM, HIDDEN)   b1: (1, HIDDEN)
      w2: (HIDDEN, OUT_DIM)     b2: (1, OUT_DIM)

    tile_rows: packed-row tile size (each packed row holds `pack`=2 batch
    rows).  Keep it a multiple of 8 and large (512-2048); on v7x pick it so
    the grid has >= 2 steps so the "parallel" axis spans both TensorCores.

    compute_dtype: f32 (exact) or bf16 (half the HBM read traffic, full bf16
    MXU rate on v5e/v6e; accumulation and bias add remain f32).  For full
    benefit callers should store x in bf16 already.
    """
    B, D = x.shape
    assert D == INPUT_DIM
    assert tile_rows % 8 == 0

    # ---- 1) Algebraic fusion (exact: there is no activation to break it). ----
    w_f = jnp.matmul(w1, w2, precision="highest")            # (D, OUT_DIM)
    b_f = jnp.matmul(b1, w2, precision="highest") + b2       # (1, OUT_DIM)

    # ---- 2) Row-pair packing -> 128-lane-dense kernel output rows. ----------
    pack = LANE // OUT_DIM if LANE % OUT_DIM == 0 else 1      # = 2 here
    K = pack * D                                              # 178
    N = pack * OUT_DIM                                        # 128
    w_f_c = w_f.astype(compute_dtype)
    w_big = jnp.zeros((K, N), compute_dtype)
    for p in range(pack):
        w_big = w_big.at[p * D:(p + 1) * D,
                         p * OUT_DIM:(p + 1) * OUT_DIM].set(w_f_c)
    b_big = jnp.tile(b_f, (1, pack)).astype(jnp.float32)      # bias stays f32

    # ---- 3) Pad the batch up to a whole number of (pack * tile_rows) rows. ---
    rows = pl.cdiv(B, pack)                       # packed rows actually needed
    rows_padded = tile_rows * pl.cdiv(rows, tile_rows)
    b_padded = rows_padded * pack
    x_c = x.astype(compute_dtype)
    if b_padded != B:
        x_c = jnp.pad(x_c, ((0, b_padded - B), (0, 0)))
    x_packed = x_c.reshape(rows_padded, K)        # free contiguous reshape

    grid = (rows_padded // tile_rows,)
    out = pl.pallas_call(
        _fused_linear_kernel,
        out_shape=jax.ShapeDtypeStruct((rows_padded, N), jnp.float32),
        grid_spec=pltpu.PrefetchScalarGridSpec(
            num_scalar_prefetch=0,
            grid=grid,
            in_specs=[
                # x: tile over packed rows; last dim (178) == full array dim.
                pl.BlockSpec((tile_rows, K), lambda i: (i, 0)),
                # fused block-diagonal weight + bias: whole array, constant
                # index map -> DMA'd once and kept resident in VMEM.
                pl.BlockSpec((K, N), lambda i: (0, 0)),
                pl.BlockSpec((1, N), lambda i: (0, 0)),
            ],
            out_specs=pl.BlockSpec((tile_rows, N), lambda i: (i, 0)),
        ),
        compiler_params=pltpu.CompilerParams(
            dimension_semantics=("parallel",),    # megacore-shardable (v7x)
        ),
    )(x_packed, w_big, b_big)

    # ---- 4) Unpack: (rows_padded, 128) -> (rows_padded*pack, 64); drop pad. --
    return out.reshape(rows_padded * pack, OUT_DIM)[:B]


def init_params(key):
    """Deterministic PyTorch-style init: U(-1/sqrt(fan_in), 1/sqrt(fan_in))."""
    k1, k2, k3, k4 = jax.random.split(key, 4)
    bound1 = 1.0 / jnp.sqrt(jnp.float32(INPUT_DIM))
    bound2 = 1.0 / jnp.sqrt(jnp.float32(HIDDEN))
    # stored as (in, out) == transpose of PyTorch's (out, in) weight
    w1 = jax.random.uniform(k1, (INPUT_DIM, HIDDEN), jnp.float32, -bound1, bound1)
    b1 = jax.random.uniform(k2, (1, HIDDEN), jnp.float32, -bound1, bound1)
    w2 = jax.random.uniform(k3, (HIDDEN, OUT_DIM), jnp.float32, -bound2, bound2)
    b2 = jax.random.uniform(k4, (1, OUT_DIM), jnp.float32, -bound2, bound2)
    return w1, b1, w2, b2


if __name__ == "__main__":
    key = jax.random.PRNGKey(0)
    kx, kp = jax.random.split(key)

    # Small demo shapes: B=500 is deliberately NOT a multiple of the tile so
    # the padding path is exercised; tile_rows=64 gives 4 grid steps.
    B = 500
    x = jax.random.normal(kx, (B, INPUT_DIM), jnp.float32)
    w1, b1, w2, b2 = init_params(kp)

    # Exact reference = original (un-fused) module math at highest precision.
    h_ref = jnp.matmul(x, w1, precision="highest") + b1
    y_ref = jnp.matmul(h_ref, w2, precision="highest") + b2

    # f32 operand path.  Tolerance covers fused-vs-unfused reassociation and
    # MXU f32 multi-pass behavior.
    y32 = jax.block_until_ready(
        organization_model_forward(x, w1, b1, w2, b2, tile_rows=64))
    assert y32.shape == (B, OUT_DIM)
    assert jnp.allclose(y32, y_ref, atol=2e-2, rtol=2e-2)

    # bf16 operand path (f32 accumulation) -- v5e/v6e recommendation.
    ybf = jax.block_until_ready(
        organization_model_forward(x, w1, b1, w2, b2, tile_rows=64,
                                   compute_dtype=jnp.bfloat16))
    assert ybf.shape == (B, OUT_DIM)
    assert jnp.allclose(ybf, y_ref, atol=5e-2, rtol=5e-2)

    # TODO(synk): configs with len(hidden_units) > 1 insert ReLU layers; those
    # would need a non-fused multi-layer kernel (fusion above is exact only
    # for the default activation-free config).

    print("KERNEL_OK")
</pallas_src>

<mosaic_0001>
module attributes {stable_mosaic.version = 11 : i64} {
  func.func @_fused_linear_kernel(%arg0: i32, %arg1: memref<64x178xf32, #tpu.memory_space<vmem>>, %arg2: memref<178x128xf32, #tpu.memory_space<vmem>>, %arg3: memref<1x128xf32, #tpu.memory_space<vmem>>, %arg4: memref<64x128xf32, #tpu.memory_space<vmem>>) attributes {dimension_semantics = [#tpu.dimension_semantics<parallel>], iteration_bounds = array<i64: 4>, scalar_prefetch = 0 : i64, scratch_operands = 0 : i64, tpu.core_type = #tpu.core_type<tc>, window_params = [{transform_indices = @transform_0, window_bounds = array<i64: 64, 178>}, {pipeline_mode = #tpu.pipeline_mode<synchronous>, transform_indices = @transform_1, window_bounds = array<i64: 178, 128>}, {pipeline_mode = #tpu.pipeline_mode<synchronous>, transform_indices = @transform_2, window_bounds = array<i64: 1, 128>}, {transform_indices = @transform_3, window_bounds = array<i64: 64, 128>}]} {
    %c0 = arith.constant 0 : index
    %c0_0 = arith.constant 0 : index
    %0 = vector.load %arg1[%c0, %c0_0] : memref<64x178xf32, #tpu.memory_space<vmem>>, vector<64x178xf32>
    %c0_1 = arith.constant 0 : index
    %c0_2 = arith.constant 0 : index
    %1 = vector.load %arg2[%c0_1, %c0_2] : memref<178x128xf32, #tpu.memory_space<vmem>>, vector<178x128xf32>
    %cst = arith.constant dense<0.000000e+00> : vector<64x128xf32>
    %2 = tpu.matmul %0, %1, %cst {dimension_numbers = #tpu.dot_dimension_numbers<[1], [0], [0], [1], [0, 0, 1, 1], [], []>} : vector<64x178xf32>, vector<178x128xf32>, vector<64x128xf32> -> vector<64x128xf32>
    %c0_3 = arith.constant 0 : index
    %c0_4 = arith.constant 0 : index
    %3 = vector.load %arg3[%c0_3, %c0_4] : memref<1x128xf32, #tpu.memory_space<vmem>>, vector<1x128xf32>
    %4 = vector.broadcast %3 : vector<1x128xf32> to vector<64x128xf32>
    %5 = arith.addf %2, %4 : vector<64x128xf32>
    %c0_5 = arith.constant 0 : index
    %c0_6 = arith.constant 0 : index
    %6 = vector.load %arg4[%c0_5, %c0_6] : memref<64x128xf32, #tpu.memory_space<vmem>>, vector<64x128xf32>
    tpu.vector_store %arg4[%c0_5, %c0_6], %5 {strides = array<i32>} : memref<64x128xf32, #tpu.memory_space<vmem>>, vector<64x128xf32>,
    return
  }
  func.func @transform_0(%arg0: i32) -> (i32, i32) {
    %c0_i32 = arith.constant 0 : i32
    %c0_i32_0 = arith.constant 0 : i32
    return %arg0, %c0_i32 : i32, i32
  }
  func.func @transform_1(%arg0: i32) -> (i32, i32) {
    %c0_i32 = arith.constant 0 : i32
    %c0_i32_0 = arith.constant 0 : i32
    %c0_i32_1 = arith.constant 0 : i32
    return %c0_i32, %c0_i32_0 : i32, i32
  }
  func.func @transform_2(%arg0: i32) -> (i32, i32) {
    %c0_i32 = arith.constant 0 : i32
    %c0_i32_0 = arith.constant 0 : i32
    %c0_i32_1 = arith.constant 0 : i32
    return %c0_i32, %c0_i32_0 : i32, i32
  }
  func.func @transform_3(%arg0: i32) -> (i32, i32) {
    %c0_i32 = arith.constant 0 : i32
    %c0_i32_0 = arith.constant 0 : i32
    return %arg0, %c0_i32 : i32, i32
  }
}

</mosaic_0001>

<llo_original>
// kernel: tpu_custom_call.1
$region0: #{tpu_custom_call.1}
  #allocation0 [shape = 'u32[]', space=smem, size = 0x4, offset = 0x4, fixed_abs, tag = 'smem constant byte address 0x4 - core index']
  #allocation1 [shape = 'u32[144,128]{1,0:T(1,128)}', space=vmem, size = 0x12000, scoped, tag = 'internal scratch']
  %s0 = inlined_call_operand.vmem [shape: f32[256,178], index: 0, kind: input, shape index: {}]
  %s1 = inlined_call_operand.vmem [shape: f32[178,128], index: 1, kind: input, shape index: {}]
  %s2 = inlined_call_operand.vmem [shape: f32[1,128], index: 2, kind: input, shape index: {}]
  %s3 = inlined_call_operand.hbm [shape: f32[256,128], index: 3, kind: output, shape index: {}]
  %s4 = sld [smem:[#allocation0]]
  $region45: #{tpu_custom_call.1} parent=0
    _
  %s6 = ssub.s32 1, %s4
  %s7 = scalar_select 0, %s6, %s4
  $region1: #{tpu_custom_call.1} parent=0
    #allocation2 [shape = 'u8[65536]{0}', space=vmem, size = 0x10000, scoped, tag = 'output window, operand 0']
    #allocation3 [shape = 's32[2]{0}', space=sflag, size = 0x8, scoped, tag = 'scoped memory for tpu_custom_call.1']
    %8 = vsyncpa [#allocation3], 0
    %s9 = scalar_lea.sflag [#allocation3], 1
    %10 = vsyncpa %s9, 0
    loop: start=0, step=1, limit=6
    $region2: #{tpu_custom_call.1} parent=1 // loop_pre_header
      _
    $region3: #{tpu_custom_call.1} parent=1 // loop_header
      %s12 = sphi 0, %s16
      %p13 = scmp.ge.s32.totalorder %s12, 6
      %s22 = sphi 0, %s24
      %s25 = sphi 0, %s22
      %s26 = sphi 0, %s25
      %s42 = sphi 0, %s26
      %s46 = sphi 0, %s46
      %s48 = sphi 0, %s46
      %s49 = sphi 0, %s48
      %s63 = sphi 0, %s49
      %s67 = sphi 0, %s67
      %s69 = sphi 0, %s67
      %s70 = sphi 0, %s69
      %s84 = sphi 0, %s70
      %s90 = sphi 0, %s92
      %s93 = sphi 0, %s90
      %s94 = sphi 0, %s93
      %s110 = sphi 0, %s94
    $region4: #{tpu_custom_call.1} parent=1 // loop_header_branch
      %15 = sbr.rel (%p13) target = $region8
    $region5: #{tpu_custom_call.1} parent=1 // loop_body
      %s17 = ssub.s32 %s12, 1
      %s18 = ssub.s32 %s12, 2
      %s19 = sadd.s32 %s12, 1
      %s20 = ssub.s32 %s12, %s19
      %p21 = scmp.eq.s32.totalorder %s20, 0
      %s23 = sadd.s32 %s22, 1
      %s24 = scalar_select %p21, %s22, %s23
      %p27 = pneg %p21
      %p28 = scmp.eq.s32.totalorder %s12, 3
      %p29 = por %p27, %p28
      %p30 = scmp.ne.s32.totalorder %s22, %s25
      %p31 = scmp.eq.s32.totalorder %s12, 0
      %p32 = por %p30, %p31
      %p33 = scmp.ne.s32.totalorder %s22, %s25
      %p34 = scmp.eq.s32.totalorder %s17, 3
      %p35 = por %p33, %p34
      %p36 = scmp.ne.s32.totalorder %s25, %s26
      %p37 = scmp.eq.s32.totalorder %s17, 0
      %p38 = por %p36, %p37
      %p39 = scmp.ne.s32.totalorder %s25, %s26
      %p40 = scmp.eq.s32.totalorder %s18, 3
      %p41 = por %p39, %p40
      %p43 = scmp.ne.s32.totalorder %s26, %s42
      %p44 = scmp.eq.s32.totalorder %s18, 0
      %p45 = por %p43, %p44
      %s47 = sadd.s32 %s46, 1
      %p50 = scmp.eq.s32.totalorder %s12, 3
      %p51 = scmp.ne.s32.totalorder %s46, %s48
      %p52 = scmp.eq.s32.totalorder %s12, 0
      %p53 = por %p51, %p52
      %p54 = scmp.ne.s32.totalorder %s46, %s48
      %p55 = scmp.eq.s32.totalorder %s17, 3
      %p56 = por %p54, %p55
      %p57 = scmp.ne.s32.totalorder %s48, %s49
      %p58 = scmp.eq.s32.totalorder %s17, 0
      %p59 = por %p57, %p58
      %p60 = scmp.ne.s32.totalorder %s48, %s49
      %p61 = scmp.eq.s32.totalorder %s18, 3
      %p62 = por %p60, %p61
      %p64 = scmp.ne.s32.totalorder %s49, %s63
      %p65 = scmp.eq.s32.totalorder %s18, 0
      %p66 = por %p64, %p65
      %s68 = sadd.s32 %s67, 1
      %p71 = scmp.eq.s32.totalorder %s12, 3
      %p72 = scmp.ne.s32.totalorder %s67, %s69
      %p73 = scmp.eq.s32.totalorder %s12, 0
      %p74 = por %p72, %p73
      %p75 = scmp.ne.s32.totalorder %s67, %s69
      %p76 = scmp.eq.s32.totalorder %s17, 3
      %p77 = por %p75, %p76
      %p78 = scmp.ne.s32.totalorder %s69, %s70
      %p79 = scmp.eq.s32.totalorder %s17, 0
      %p80 = por %p78, %p79
      %p81 = scmp.ne.s32.totalorder %s69, %s70
      %p82 = scmp.eq.s32.totalorder %s18, 3
      %p83 = por %p81, %p82
      %p85 = scmp.ne.s32.totalorder %s70, %s84
      %p86 = scmp.eq.s32.totalorder %s18, 0
      %p87 = por %p85, %p86
      %s88 = ssub.s32 %s12, %s19
      %p89 = scmp.eq.s32.totalorder %s88, 0
      %s91 = sadd.s32 %s90, 1
      %s92 = scalar_select %p89, %s90, %s91
      %p95 = pneg %p89
      %p96 = scmp.eq.s32.totalorder %s12, 3
      %p97 = por %p95, %p96
      %p98 = scmp.ne.s32.totalorder %s90, %s93
      %p99 = scmp.eq.s32.totalorder %s12, 0
      %p100 = por %p98, %p99
      %p101 = scmp.ne.s32.totalorder %s90, %s93
      %p102 = scmp.eq.s32.totalorder %s17, 3
      %p103 = por %p101, %p102
      %p104 = scmp.ne.s32.totalorder %s93, %s94
      %p105 = scmp.eq.s32.totalorder %s17, 0
      %p106 = por %p104, %p105
      %p107 = scmp.ne.s32.totalorder %s93, %s94
      %p108 = scmp.eq.s32.totalorder %s18, 3
      %p109 = por %p107, %p108
      %p111 = scmp.ne.s32.totalorder %s94, %s110
      %p112 = scmp.eq.s32.totalorder %s18, 0
      %p113 = por %p111, %p112
      %p114 = scmp.le.s32.totalorder 1, %s12
      %p115 = scmp.lt.s32.totalorder %s12, 5
      %p116 = pnand %p114, %p115
      %p117 = pneg %p116
      // Predicated region
      $region9: #{tpu_custom_call.1} parent=5 // pred_check
        _
      $region10: #{tpu_custom_call.1} parent=5 // pred_check_branch
        %119 = sbr.rel (%p116) target = $region12
      $region11: #{tpu_custom_call.1} parent=5 // pred_region
        %s120 = ssub.s32 %s12, 1
        // Predicated region
        $region13: #{tpu_custom_call.1} parent=11 // pred_check
          %p121 = pneg %p59
        $region14: #{tpu_custom_call.1} parent=11 // pred_check_branch
          %123 = sbr.rel (%p121) target = $region16
        $region15: #{tpu_custom_call.1} parent=11 // pred_region
          _
        $region16: #{tpu_custom_call.1} parent=11 // pred_fallthru
          _
        // Predicated region
        $region17: #{tpu_custom_call.1} parent=11 // pred_check
          %p124 = pneg %p80
        $region18: #{tpu_custom_call.1} parent=11 // pred_check_branch
          %126 = sbr.rel (%p124) target = $region20
        $region19: #{tpu_custom_call.1} parent=11 // pred_region
          _
        $region20: #{tpu_custom_call.1} parent=11 // pred_fallthru
          _
      $region12: #{tpu_custom_call.1} parent=5 // pred_fallthru
        _
      %p127 = scmp.lt.s32.totalorder %s12, 4
      // Predicated region
      $region21: #{tpu_custom_call.1} parent=5 // pred_check
        %p128 = pneg %p127
      $region22: #{tpu_custom_call.1} parent=5 // pred_check_branch
        %130 = sbr.rel (%p128) target = $region24
      $region23: #{tpu_custom_call.1} parent=5 // pred_region
        // Predicated region
        $region25: #{tpu_custom_call.1} parent=23 // pred_check
          %p131 = pneg %p32
        $region26: #{tpu_custom_call.1} parent=23 // pred_check_branch
          %133 = sbr.rel (%p131) target = $region28
        $region27: #{tpu_custom_call.1} parent=23 // pred_region
          %s134 = smul.u32 8, %s12
          %p135 = scmp.lt.s32.totalorder %s134, 31
          %s136 = scalar_select %p135, %s134, 31
          %s137 = smul.addr %s136, 2
          %s138 = smul.addr %s137, 8
          %s139 = scalar_lea.vmem %s0, %s138
          %s140 = smul.u32 8, %s12
        $region28: #{tpu_custom_call.1} parent=23 // pred_fallthru
          _
      $region24: #{tpu_custom_call.1} parent=5 // pred_fallthru
        _
      %p141 = scmp.le.s32.totalorder 1, %s12
      %p142 = scmp.lt.s32.totalorder %s12, 5
      %p143 = pnand %p141, %p142
      %p144 = pneg %p143
      // Predicated region
      $region29: #{tpu_custom_call.1} parent=5 // pred_check
        _
      $region30: #{tpu_custom_call.1} parent=5 // pred_check_branch
        %146 = sbr.rel (%p143) target = $region32
      $region31: #{tpu_custom_call.1} parent=5 // pred_region
        %s147 = ssub.s32 %s12, 1
        %s148 = smul.u32 8, %s17
        %p149 = scmp.lt.s32.totalorder %s148, 31
        %s150 = scalar_select %p149, %s148, 31
        %s151 = smul.addr %s150, 2
        %s152 = smul.addr %s151, 8
        %s153 = scalar_lea.vmem %s0, %s152
        %p154 = pneg %p38
        %p155 = pneg %p35
        %p156 = pneg %p59
        %p157 = pneg %p56
        %p158 = pneg %p80
        %p159 = pneg %p77
        %p160 = pneg %p106
        %p161 = pneg %p103
        %s162 = sand.u32 %s93, 1
        %s163 = scalar_lea.sflag [#allocation3], %s162
        %s164 = sand.u32 %s93, 1
        %s165 = smul.addr %s164, 64
        %s166 = scalar_lea.vmem [#allocation2], %s165
        %s167 = smul.u32 8, %s17
        %p168 = scmp.lt.s32.totalorder %s167, 31
        %s169 = scalar_select %p168, %s167, 31
        %s170 = smul.addr %s169, 2
        %s171 = smul.addr %s170, 8
        %s172 = scalar_lea.vmem %s0, %s171
        %s173 = smul.u32 8, %s17
        %s174 = smul.u32 8, %s17
        %v175 = vld [vmem:[%s172] sm:$0xff]
        %v176 = vld [vmem:[%s172 + $0x8] sm:$0xff]
        %v177 = vld [vmem:[%s172 + $0x10] sm:$0xff]
        %v178 = vld [vmem:[%s172 + $0x18] sm:$0xff]
        %v179 = vld [vmem:[%s172 + $0x20] sm:$0xff]
        %v180 = vld [vmem:[%s172 + $0x28] sm:$0xff]
        %v181 = vld [vmem:[%s172 + $0x30] sm:$0xff]
        %v182 = vld [vmem:[%s172 + $0x38] sm:$0xff]
        %v183 = vld [vmem:[%s172 + $0x40] sm:$0xff]
        %v184 = vld [vmem:[%s172 + $0x48] sm:$0xff]
        %v185 = vld [vmem:[%s172 + $0x50] sm:$0xff]
        %v186 = vld [vmem:[%s172 + $0x58] sm:$0xff]
        %v187 = vld [vmem:[%s172 + $0x60] sm:$0xff]
        %v188 = vld [vmem:[%s172 + $0x68] sm:$0xff]
        %v189 = vld [vmem:[%s172 + $0x70] sm:$0xff]
        %v190 = vld [vmem:[%s172 + $0x78] sm:$0xff]
        %v191 = vld [vmem:[%s1] sm:$0xff]
        %v192 = vld [vmem:[%s1 + $0x8] sm:$0xff]
        %v193 = vld [vmem:[%s1 + $0x10] sm:$0xff]
        %v194 = vld [vmem:[%s1 + $0x18] sm:$0xff]
        %v195 = vld [vmem:[%s1 + $0x20] sm:$0xff]
        %v196 = vld [vmem:[%s1 + $0x28] sm:$0xff]
        %v197 = vld [vmem:[%s1 + $0x30] sm:$0xff]
        %v198 = vld [vmem:[%s1 + $0x38] sm:$0xff]
        %v199 = vld [vmem:[%s1 + $0x40] sm:$0xff]
        %v200 = vld [vmem:[%s1 + $0x48] sm:$0xff]
        %v201 = vld [vmem:[%s1 + $0x50] sm:$0xff]
        %v202 = vld [vmem:[%s1 + $0x58] sm:$0xff]
        %v203 = vld [vmem:[%s1 + $0x60] sm:$0xff]
        %v204 = vld [vmem:[%s1 + $0x68] sm:$0xff]
        %v205 = vld [vmem:[%s1 + $0x70] sm:$0xff]
        %v206 = vld [vmem:[%s1 + $0x78] sm:$0xff]
        %v207 = vld [vmem:[%s1 + $0x80] sm:$0xff]
        %v208 = vld [vmem:[%s1 + $0x88] sm:$0xff]
        %v209 = vld [vmem:[%s1 + $0x90] sm:$0xff]
        %v210 = vld [vmem:[%s1 + $0x98] sm:$0xff]
        %v211 = vld [vmem:[%s1 + $0xa0] sm:$0xff]
        %v212 = vld [vmem:[%s1 + $0xa8] sm:$0xff]
        %v213 = vld [vmem:[%s1 + $0xb0] sm:$0x3]
        %v214 = vld [vmem:[%s2] sm:$0x1]
        %v216 = vlaneseq
        %v217 = vshrl.u32 %v216, 7
        %v218 = vsub.s32 0, %v217
        %v219 = vrot.slane %v214, %v218
        %vm221 = vcmask 408576
        %v223 = vsel %vm221, %v176, 0
        %v226 = vsel %vm221, %v178, 0
        %v229 = vsel %vm221, %v180, 0
        %v232 = vsel %vm221, %v182, 0
        %v235 = vsel %vm221, %v184, 0
        %v238 = vsel %vm221, %v186, 0
        %v241 = vsel %vm221, %v188, 0
        %v244 = vsel %vm221, %v190, 0
        %vm246 = vcmask 1041408
        %v248 = vsel %vm246, %v213, 0
        %250 = vmatprep.subr.mxu0 0.0
        %251 = vmatpush1.msra.mxu0 %v191
        %252 = vmatprep.subr.mxu0 0.0
        %253 = vmatpush1.msra.mxu0 %v192
        %254 = vmatprep.subr.mxu0 0.0
        %255 = vmatpush1.msra.mxu0 %v193
        %256 = vmatprep.subr.mxu0 0.0
        %257 = vmatpush1.msra.mxu0 %v194
        %258 = vmatprep.subr.mxu0 0.0
        %259 = vmatpush1.msra.mxu0 %v195
        %260 = vmatprep.subr.mxu0 0.0
        %261 = vmatpush1.msra.mxu0 %v196
        %262 = vmatprep.subr.mxu0 0.0
        %263 = vmatpush1.msra.mxu0 %v197
        %264 = vmatprep.subr.mxu0 0.0
        %265 = vmatpush1.msra.mxu0 %v198
        %266 = vmatprep.subr.mxu0 0.0
        %267 = vmatpush1.msra.mxu0 %v199
        %268 = vmatprep.subr.mxu0 0.0
        %269 = vmatpush1.msra.mxu0 %v200
        %270 = vmatprep.subr.mxu0 0.0
        %271 = vmatpush1.msra.mxu0 %v201
        %272 = vmatprep.subr.mxu0 0.0
        %273 = vmatpush1.msra.mxu0 %v202
        %274 = vmatprep.subr.mxu0 0.0
        %275 = vmatpush1.msra.mxu0 %v203
        %276 = vmatprep.subr.mxu0 0.0
        %277 = vmatpush1.msra.mxu0 %v204
        %278 = vmatprep.subr.mxu0 0.0
        %279 = vmatpush1.msra.mxu0 %v205
        %280 = vmatprep.subr.mxu0 0.0
        %281 = vmatpush1.msra.mxu0 %v206
        %282 = vmatprep.subr.mxu0 0.0
        %283 = vmatpush1.msra.mxu0 %v207
        %284 = vmatprep.subr.mxu0 0.0
        %285 = vmatpush1.msra.mxu0 %v208
        %286 = vmatprep.subr.mxu0 0.0
        %287 = vmatpush1.msra.mxu0 %v209
        %288 = vmatprep.subr.mxu0 0.0
        %289 = vmatpush1.msra.mxu0 %v210
        %290 = vmatprep.subr.mxu0 0.0
        %291 = vmatpush1.msra.mxu0 %v211
        %292 = vmatprep.subr.mxu0 0.0
        %293 = vmatpush1.msra.mxu0 %v212
        %294 = vmatprep.subr.mxu0 0.0
        %295 = vmatpush1.msra.mxu0 %v248
        %296 = vmatprep.subr.mxu0 0.0
        %297 = vmatpush1.msra.mxu0 0.0
        %298 = vmatprep.subr.mxu0 0.0
        %299 = vmatpush1.msra.mxu0 0.0
        %300 = vmatprep.subr.mxu0 0.0
        %301 = vmatpush1.msra.mxu0 0.0
        %302 = vmatprep.subr.mxu0 0.0
        %303 = vmatpush1.msra.mxu0 0.0
        %304 = vmatprep.subr.mxu0 0.0
        %305 = vmatpush1.msra.mxu0 0.0
        %306 = vmatprep.subr.mxu0 0.0
        %307 = vmatpush1.msra.mxu0 0.0
        %308 = vmatprep.subr.mxu0 0.0
        %309 = vmatpush1.msra.mxu0 0.0
        %310 = vmatprep.subr.mxu0 0.0
        %311 = vmatpush1.msra.mxu0 0.0
        %312 = vmatprep.subr.mxu0 0.0
        %313 = vmatpush1.msra.mxu0 0.0
        %314 = vmatprep.mubr.f32.mxu0 %v223
        %315 = vmatmul.mubr.f32.gmra.mrb[0].mxu0 %v175
        %v316 = vpop.f32.mrb[0].mxu0
        %v317 = vadd.f32 %v219, %v316
        %v318 = vpop.f32.mrb[0].mxu0
        %319 = vmatprep.mubr.f32.mxu0 %v226
        %320 = vmatmul.mubr.f32.gmra.mrb[0].mxu0 %v177
        %v321 = vpop.f32.mrb[0].mxu0
        %v322 = vadd.f32 %v219, %v321
        %v323 = vpop.f32.mrb[0].mxu0
        %324 = vmatprep.mubr.f32.mxu0 %v229
        %325 = vmatmul.mubr.f32.gmra.mrb[0].mxu0 %v179
        %v326 = vpop.f32.mrb[0].mxu0
        %v327 = vadd.f32 %v219, %v326
        %v328 = vpop.f32.mrb[0].mxu0
        %329 = vmatprep.mubr.f32.mxu0 %v232
        %330 = vmatmul.mubr.f32.gmra.mrb[0].mxu0 %v181
        %v331 = vpop.f32.mrb[0].mxu0
        %v332 = vadd.f32 %v219, %v331
        %v333 = vpop.f32.mrb[0].mxu0
        %334 = vmatprep.mubr.f32.mxu0 %v235
        %335 = vmatmul.mubr.f32.gmra.mrb[0].mxu0 %v183
        %v336 = vpop.f32.mrb[0].mxu0
        %v337 = vadd.f32 %v219, %v336
        %v338 = vpop.f32.mrb[0].mxu0
        %339 = vmatprep.mubr.f32.mxu0 %v238
        %340 = vmatmul.mubr.f32.gmra.mrb[0].mxu0 %v185
        %v341 = vpop.f32.mrb[0].mxu0
        %v342 = vadd.f32 %v219, %v341
        %v343 = vpop.f32.mrb[0].mxu0
        %344 = vmatprep.mubr.f32.mxu0 %v241
        %345 = vmatmul.mubr.f32.gmra.mrb[0].mxu0 %v187
        %v346 = vpop.f32.mrb[0].mxu0
        %v347 = vadd.f32 %v219, %v346
        %v348 = vpop.f32.mrb[0].mxu0
        %349 = vmatprep.mubr.f32.mxu0 %v244
        %350 = vmatmul.mubr.f32.gmra.mrb[0].mxu0 %v189
        %v351 = vpop.f32.mrb[0].mxu0
        %v352 = vadd.f32 %v219, %v351
        %v353 = vpop.f32.mrb[0].mxu0
        %354 = vdwg.mxu0
        %355 = vst [vmem:[%s166] sm:$0xff] %v317
        %356 = vst [vmem:[%s166 + $0x8] sm:$0xff] %v322
        %357 = vst [vmem:[%s166 + $0x10] sm:$0xff] %v327
        %358 = vst [vmem:[%s166 + $0x18] sm:$0xff] %v332
        %359 = vst [vmem:[%s166 + $0x20] sm:$0xff] %v337
        %360 = vst [vmem:[%s166 + $0x28] sm:$0xff] %v342
        %361 = vst [vmem:[%s166 + $0x30] sm:$0xff] %v347
        %362 = vst [vmem:[%s166 + $0x38] sm:$0xff] %v352
        %s363 = sand.u32 %s93, 1
        %s364 = scalar_lea.sflag [#allocation3], %s363
        %s365 = sand.u32 %s93, 1
        %s366 = smul.addr %s365, 64
        %s367 = scalar_lea.vmem [#allocation2], %s366
        // Predicated region
        $region33: #{tpu_custom_call.1} parent=31 // pred_check
          %p368 = pneg %p103
        $region34: #{tpu_custom_call.1} parent=31 // pred_check_branch
          %370 = sbr.rel (%p368) target = $region36
        $region35: #{tpu_custom_call.1} parent=31 // pred_region
          %s371 = smul.u32 8, %s17
          %s373 = ssub.s32 1024, 1024
          %374 = vsyncadd %s364, %s373
          %s375 = smul.addr %s371, 128
          %s376 = scalar_lea.hbm %s3, %s375
          %s377 = sshll.u32 %s367, 4
          %s378 = int_to_ptr.vmem [resolvable:$true] %s377
          %383 = dma.vmem_to_hbm [thread:$0]  %s378, 1024, %s376, %s364, 128, 128, 8
        $region36: #{tpu_custom_call.1} parent=31 // pred_fallthru
          _
      $region32: #{tpu_custom_call.1} parent=5 // pred_fallthru
        _
      %p384 = scmp.le.s32.totalorder 2, %s12
      // Predicated region
      $region37: #{tpu_custom_call.1} parent=5 // pred_check
        %p385 = pneg %p384
      $region38: #{tpu_custom_call.1} parent=5 // pred_check_branch
        %387 = sbr.rel (%p385) target = $region40
      $region39: #{tpu_custom_call.1} parent=5 // pred_region
        %s388 = ssub.s32 %s12, 2
        // Predicated region
        $region41: #{tpu_custom_call.1} parent=39 // pred_check
          %p389 = pneg %p109
        $region42: #{tpu_custom_call.1} parent=39 // pred_check_branch
          %391 = sbr.rel (%p389) target = $region44
        $region43: #{tpu_custom_call.1} parent=39 // pred_region
          %s392 = sand.u32 %s94, 1
          %s393 = scalar_lea.sflag [#allocation3], %s392
          %s394 = sand.u32 %s94, 1
          %s395 = smul.addr %s394, 64
          %s396 = scalar_lea.vmem [#allocation2], %s395
          %397 = dma.done %s393, 1024
        $region44: #{tpu_custom_call.1} parent=39 // pred_fallthru
          _
      $region40: #{tpu_custom_call.1} parent=5 // pred_fallthru
        _
    $region6: #{tpu_custom_call.1} parent=1 // loop_footer
      %s16 = sadd.s32 1, %s12
    $region7: #{tpu_custom_call.1} parent=1 // loop_footer_branch
      %11 = sbr.rel target = $region3
    $region8: #{tpu_custom_call.1} parent=1 // loop_exit
      _
    %398 = vsyncpa [#allocation3], 1
    %s399 = scalar_lea.sflag [#allocation3], 1
    %400 = vsyncpa %s399, 1

</llo_original>
